<compile_context>
chip_gen: v6e
topology: v6e:2x2x1
jax: 0.10.0
libtpu: 0.0.40
codegen_flags: <defaults>
</compile_context>

<pallas_src>
import functools
import math

import numpy as np
import jax
import jax.numpy as jnp
from jax.experimental import pallas as pl
from jax.experimental.pallas import tpu as pltpu


# ---------------------------------------------------------------------------
# Tiling helpers
# ---------------------------------------------------------------------------

def _pick_lane_tile(n, cap):
    """Largest multiple of 128 that divides n and is <= cap; else n (full dim)."""
    if n % 128 != 0:
        return n
    best = 128
    t = 128
    limit = min(n, cap)
    while t <= limit:
        if n % t == 0:
            best = t
        t += 128
    return best


def _row_tile(n, cap):
    """Sublane-dim tile: multiple-of-8 divisor of n (<= cap), else the full dim."""
    if n <= cap:
        return n
    best = n
    t = 8
    while t <= cap:
        if n % t == 0:
            best = t
        t += 8
    return best


def _divisor_le(n, cap):
    """Largest divisor of n that is <= cap (for leading / untiled dims)."""
    best = 1
    for t in range(1, min(n, cap) + 1):
        if n % t == 0:
            best = t
    return best


# ---------------------------------------------------------------------------
# Pallas kernels
# ---------------------------------------------------------------------------

def _affine_gather_kernel(tbl_ref, cnt_ref, sidx_ref, img_ref, out_ref, acc_ref,
                          *, ST, KMAX):
    """Pruned one-hot gather for ShearX/Y and Rotate (nearest neighbour).

    Grid = (out_tiles, KMAX).  The host precomputed the nearest source index of
    every output pixel (sidx, -1 for out-of-bounds -> fill 0) and, per output
    tile, the list of source tiles that contribute (tbl/cnt scalar prefetch).
    Only those source tiles are DMAed / compared; padded slots are skipped.
    """
    j = pl.program_id(0)
    k = pl.program_id(1)

    @pl.when(k == 0)
    def _():
        acc_ref[...] = jnp.zeros_like(acc_ref)

    @pl.when(k < cnt_ref[j])
    def _():
        sbase = tbl_ref[j * KMAX + k] * ST
        src = sidx_ref[...]                                     # (1, OT) int32
        OT = src.shape[1]
        i_in = sbase + jax.lax.broadcasted_iota(jnp.int32, (ST, OT), 0)
        sel = (i_in == src).astype(jnp.bfloat16)                # per-tile one-hot
        acc_ref[...] += jnp.dot(img_ref[...], sel,
                                preferred_element_type=jnp.float32)

    @pl.when(k == KMAX - 1)
    def _():
        out_ref[...] = acc_ref[...].astype(out_ref.dtype)       # exact integers


def _translate_kernel(x_ref, o_ref, *, tx, ty, H, W):
    """Integer-pixel translation: pltpu.roll (XLU) + zero fill outside."""
    bc = x_ref.shape[0]
    iy = jax.lax.broadcasted_iota(jnp.int32, (H, W), 0)
    ix = jax.lax.broadcasted_iota(jnp.int32, (H, W), 1)
    valid = ((iy - ty >= 0) & (iy - ty <= H - 1)
             & (ix - tx >= 0) & (ix - tx <= W - 1))
    sy = ty % H
    sx = tx % W
    for c in range(bc):
        r = x_ref[c]
        if sy != 0:
            r = pltpu.roll(r, sy, 0)
        if sx != 0:
            r = pltpu.roll(r, sx, 1)
        o_ref[c] = jnp.where(valid, r, jnp.zeros_like(r)).astype(o_ref.dtype)


def _brightness_kernel(p_ref, x_ref, o_ref):
    # p[0] = brightness factor (1 + magnitude); blend with black + uint8 trunc.
    x = x_ref[...].astype(jnp.float32)
    o_ref[...] = jnp.floor(jnp.clip(x * p_ref[0], 0.0, 255.0)).astype(o_ref.dtype)


def _solarize_kernel(p_ref, x_ref, o_ref):
    # p[0] = threshold; invert pixels >= threshold (bound = 255 for uint8).
    x = x_ref[...].astype(jnp.float32)
    o_ref[...] = jnp.where(x >= p_ref[0], 255.0 - x, x).astype(o_ref.dtype)


def _posterize_kernel(p_ref, x_ref, o_ref):
    # p = [q, 1/q] with q = 2**(8 - bits); keep only the top `bits` bits.
    q = p_ref[0]
    inv_q = p_ref[1]
    x = x_ref[...].astype(jnp.float32)
    o_ref[...] = (jnp.floor(x * inv_q) * q).astype(o_ref.dtype)


def _autocontrast_kernel(x_ref, o_ref):
    # x_ref block: (rows, H*W); per-channel min/max rescale to [0, 255].
    x = x_ref[...].astype(jnp.float32)
    mn = jnp.min(x, axis=1, keepdims=True)
    mx = jnp.max(x, axis=1, keepdims=True)
    eq = mx == mn
    scale = 255.0 / jnp.where(eq, 1.0, mx - mn)
    y = jnp.where(eq, x, jnp.clip((x - mn) * scale, 0.0, 255.0))
    o_ref[...] = jnp.floor(y).astype(o_ref.dtype)


def _contrast_kernel(p_ref, x_ref, o_ref):
    # x_ref block: (bn, C, H*W), bn batch elements.  p[0] = contrast factor.
    f = p_ref[0]
    x = x_ref[...].astype(jnp.float32)
    C = x.shape[1]
    if C == 3:
        gray = jnp.floor(0.2989 * x[:, 0:1, :] + 0.587 * x[:, 1:2, :]
                         + 0.114 * x[:, 2:3, :])              # rgb_to_grayscale -> uint8
    else:
        gray = x
    mean = jnp.mean(gray, axis=(1, 2), keepdims=True)
    y = jnp.clip(f * x + (1.0 - f) * mean, 0.0, 255.0)
    o_ref[...] = jnp.floor(y).astype(o_ref.dtype)


def _sharpness_kernel(p_ref, x_ref, o_ref):
    # x_ref block: (bc, H, W), bc image-channels.  p[0] = sharpness factor.
    # 3x3 kernel [[1,1,1],[1,5,1],[1,1,1]]/13 applied to the interior only
    # (borders untouched), computed with XLU rolls (no band matmuls).
    f = p_ref[0]
    bc, H, W = x_ref.shape
    iy = jax.lax.broadcasted_iota(jnp.int32, (H, W), 0)
    ix = jax.lax.broadcasted_iota(jnp.int32, (H, W), 1)
    interior = (iy >= 1) & (iy <= H - 2) & (ix >= 1) & (ix <= W - 2)
    for c in range(bc):
        x = x_ref[c].astype(jnp.float32)
        hsum = x + pltpu.roll(x, 1, 1) + pltpu.roll(x, W - 1, 1)
        box = hsum + pltpu.roll(hsum, 1, 0) + pltpu.roll(hsum, H - 1, 0)
        blur = jnp.round((box + 4.0 * x) * (1.0 / 13.0))      # blurred-degenerate
        blended = jnp.clip(f * x + (1.0 - f) * blur, 0.0, 255.0)
        o_ref[c] = jnp.floor(jnp.where(interior, blended, x)).astype(o_ref.dtype)


def _equalize_hist_kernel(x_ref, lut_ref, hist_ref, *, HW):
    """Pass 1 of Equalize: tiled 256-bin histogram + LUT build (per channel)."""
    j = pl.program_id(1)

    @pl.when(j == 0)
    def _():
        hist_ref[...] = jnp.zeros_like(hist_ref)

    pix = x_ref[0].astype(jnp.float32)                          # (1, chunk)
    vcol = jax.lax.broadcasted_iota(jnp.float32, (256, 1), 0)
    oh = (pix == vcol).astype(jnp.float32)                      # (256, chunk)
    hist_ref[...] += jnp.sum(oh, axis=1, keepdims=True)

    @pl.when(j == pl.num_programs(1) - 1)
    def _():
        hist = hist_ref[...]                                    # (256, 1)
        idxf = jax.lax.broadcasted_iota(jnp.float32, (256, 1), 0)
        idxi = jax.lax.broadcasted_iota(jnp.int32, (256, 1), 0)
        maxv = jnp.max(jnp.where(hist > 0.0, idxf, -1.0))
        cnt_max = jnp.sum(jnp.where(idxf == maxv, hist, 0.0))
        step = jnp.floor((HW - cnt_max) * (1.0 / 255.0))        # nonzero_hist[:-1].sum() // 255
        cum = hist                                              # log-step prefix sum (XLU rolls)
        for s in (1, 2, 4, 8, 16, 32, 64, 128):
            cum = cum + jnp.where(idxi >= s, pltpu.roll(cum, s, 0), 0.0)
        cum = cum - hist                                        # exclusive cumsum
        lut = jnp.floor((cum + jnp.floor(step * 0.5)) / jnp.maximum(step, 1.0))
        lut = jnp.clip(lut, 0.0, 255.0)
        lut = jnp.where(step > 0.0, lut, idxf)                  # identity LUT if step == 0
        lut_ref[0] = lut.astype(lut_ref.dtype)


def _equalize_apply_kernel(x_ref, lut_ref, o_ref):
    """Pass 2 of Equalize: apply the per-channel LUT, lane-dense chunks."""
    # TODO(synk): bit-sliced LUT apply (log2 256 selects) instead of 256 masked sums.
    pix = x_ref[0].astype(jnp.float32)                          # (1, chunk)
    lut = lut_ref[0]                                            # (256, 1)
    vcol = jax.lax.broadcasted_iota(jnp.float32, (256, 1), 0)
    oh = (pix == vcol).astype(jnp.float32)
    o_ref[0] = jnp.sum(oh * lut, axis=0, keepdims=True).astype(o_ref.dtype)


# ---------------------------------------------------------------------------
# pallas_call wrappers (plain-JAX / numpy glue: host tables, reshapes)
# ---------------------------------------------------------------------------

def _affine_nearest(x2, matrix, H, W):
    """ShearX/Y, Rotate: pruned nearest-neighbour gather.  x2: (N*C, H*W) bf16."""
    NC, HW = x2.shape
    t0, t1, t2, t3, t4, t5 = [np.float32(v) for v in matrix]

    # Host-side (numpy f32, mirroring torch's float grid_sample path) nearest
    # source index of every output pixel; -1 marks out-of-bounds (fill = 0).
    o = np.arange(HW, dtype=np.int32)
    ox = (o % W).astype(np.float32)
    oy = (o // W).astype(np.float32)
    cx = np.float32((W - 1) * 0.5)
    cy = np.float32((H - 1) * 0.5)
    xc = ox - cx
    yc = oy - cy
    sx = t0 * xc + t1 * yc + t2 + cx
    sy = t3 * xc + t4 * yc + t5 + cy
    rx = np.round(sx)
    ry = np.round(sy)
    valid = (rx >= 0) & (rx <= W - 1) & (ry >= 0) & (ry <= H - 1)
    src = (np.clip(ry, 0, H - 1).astype(np.int64) * W
           + np.clip(rx, 0, W - 1).astype(np.int64))
    src_idx = np.where(valid, src, -1).astype(np.int32)

    OT = _pick_lane_tile(HW, 256)      # small tiles: intermediates stay in vregs
    ST = _pick_lane_tile(HW, 512)
    n_out = HW // OT
    n_src = HW // ST

    # Per-output-tile list of source tiles that actually contribute.
    tiles = []
    for j in range(n_out):
        s = src_idx[j * OT:(j + 1) * OT]
        s = s[s >= 0]
        tiles.append(np.unique(s // ST) if s.size else np.zeros((0,), np.int64))
    kmax = max(1, max(len(t) for t in tiles))
    tbl = np.zeros((n_out, kmax), dtype=np.int32)
    cnt = np.zeros((n_out,), dtype=np.int32)
    for j, t in enumerate(tiles):
        cnt[j] = len(t)
        if len(t):
            tbl[j, :len(t)] = t
            tbl[j, len(t):] = t[-1]     # pad = repeat last entry (DMA dedups)

    tbl_flat = jnp.asarray(tbl.reshape(-1))          # 1-D: cheap SMEM padding
    cnt_arr = jnp.asarray(cnt)
    sidx = jnp.asarray(src_idx.reshape(1, HW))

    kern = functools.partial(_affine_gather_kernel, ST=ST, KMAX=kmax)
    return pl.pallas_call(
        kern,
        out_shape=jax.ShapeDtypeStruct((NC, HW), jnp.bfloat16),
        grid_spec=pltpu.PrefetchScalarGridSpec(
            num_scalar_prefetch=2,
            grid=(n_out, kmax),
            in_specs=[
                pl.BlockSpec((1, OT), lambda j, k, tbl, cnt: (0, j)),
                pl.BlockSpec((NC, ST),
                             lambda j, k, tbl, cnt: (0, tbl[j * kmax + k])),
            ],
            out_specs=pl.BlockSpec((NC, OT), lambda j, k, tbl, cnt: (0, j)),
            scratch_shapes=[pltpu.VMEM((NC, OT), jnp.float32)]),
        compiler_params=pltpu.CompilerParams(
            dimension_semantics=("parallel", "arbitrary"),
            vmem_limit_bytes=32 * 1024 * 1024),
    )(tbl_flat, cnt_arr, sidx, x2)


def _translate(x3, tx, ty):
    # x3: (N*C, H, W) bf16; integer shifts -> roll + mask, batched channels.
    NC, H, W = x3.shape
    bc = _divisor_le(NC, 8)
    return pl.pallas_call(
        functools.partial(_translate_kernel, tx=tx, ty=ty, H=H, W=W),
        out_shape=jax.ShapeDtypeStruct((NC, H, W), jnp.bfloat16),
        grid=(NC // bc,),
        in_specs=[pl.BlockSpec((bc, H, W), lambda i: (i, 0, 0))],
        out_specs=pl.BlockSpec((bc, H, W), lambda i: (i, 0, 0)),
        compiler_params=pltpu.CompilerParams(dimension_semantics=("parallel",)),
    )(x3)


def _pointwise_call(kernel, x2, params):
    # x2: (N*C, H*W) bf16; (rows, lanes) 2-D grid, both axes "parallel".
    NC, HW = x2.shape
    p = jnp.asarray(params, dtype=jnp.float32)
    lane_tile = _pick_lane_tile(HW, 1024)
    row_tile = _row_tile(NC, 256)
    return pl.pallas_call(
        kernel,
        out_shape=jax.ShapeDtypeStruct((NC, HW), jnp.bfloat16),
        grid=(NC // row_tile, HW // lane_tile),
        in_specs=[pl.BlockSpec(memory_space=pltpu.MemorySpace.SMEM),
                  pl.BlockSpec((row_tile, lane_tile), lambda i, j: (i, j))],
        out_specs=pl.BlockSpec((row_tile, lane_tile), lambda i, j: (i, j)),
        compiler_params=pltpu.CompilerParams(
            dimension_semantics=("parallel", "parallel")),
    )(p, x2)


def _autocontrast(x2):
    # Per-channel min/max rescale; gridded over channel-row tiles.
    NC, HW = x2.shape
    row_tile = _row_tile(NC, 8)
    return pl.pallas_call(
        _autocontrast_kernel,
        out_shape=jax.ShapeDtypeStruct((NC, HW), jnp.bfloat16),
        grid=(NC // row_tile,),
        in_specs=[pl.BlockSpec((row_tile, HW), lambda i: (i, 0))],
        out_specs=pl.BlockSpec((row_tile, HW), lambda i: (i, 0)),
        compiler_params=pltpu.CompilerParams(dimension_semantics=("parallel",)),
    )(x2)


def _contrast(x3, factor):
    # x3: (N, C, H*W) bf16; batch up to 8 batch elements per grid step.
    N, C, HW = x3.shape
    bn = _divisor_le(N, 8)
    p = jnp.asarray([factor], dtype=jnp.float32)
    return pl.pallas_call(
        _contrast_kernel,
        out_shape=jax.ShapeDtypeStruct((N, C, HW), jnp.bfloat16),
        grid=(N // bn,),
        in_specs=[pl.BlockSpec(memory_space=pltpu.MemorySpace.SMEM),
                  pl.BlockSpec((bn, C, HW), lambda i: (i, 0, 0))],
        out_specs=pl.BlockSpec((bn, C, HW), lambda i: (i, 0, 0)),
        compiler_params=pltpu.CompilerParams(dimension_semantics=("parallel",)),
    )(p, x3)


def _sharpness(x3, factor):
    # x3: (N*C, H, W) bf16; batch up to 8 channels per grid step.
    NC, H, W = x3.shape
    bc = _divisor_le(NC, 8)
    p = jnp.asarray([factor], dtype=jnp.float32)
    return pl.pallas_call(
        _sharpness_kernel,
        out_shape=jax.ShapeDtypeStruct((NC, H, W), jnp.bfloat16),
        grid=(NC // bc,),
        in_specs=[pl.BlockSpec(memory_space=pltpu.MemorySpace.SMEM),
                  pl.BlockSpec((bc, H, W), lambda i: (i, 0, 0))],
        out_specs=pl.BlockSpec((bc, H, W), lambda i: (i, 0, 0)),
        compiler_params=pltpu.CompilerParams(dimension_semantics=("parallel",)),
    )(p, x3)


def _equalize(x3):
    # x3: (N*C, 1, H*W) bf16; two tiled passes (histogram/LUT, then LUT apply).
    NC, _, HW = x3.shape
    chunk = _pick_lane_tile(HW, 2048)
    n_chunks = HW // chunk
    lut = pl.pallas_call(
        functools.partial(_equalize_hist_kernel, HW=HW),
        out_shape=jax.ShapeDtypeStruct((NC, 256, 1), jnp.float32),
        grid=(NC, n_chunks),
        in_specs=[pl.BlockSpec((1, 1, chunk), lambda i, j: (i, 0, j))],
        out_specs=pl.BlockSpec((1, 256, 1), lambda i, j: (i, 0, 0)),
        scratch_shapes=[pltpu.VMEM((256, 1), jnp.float32)],
        compiler_params=pltpu.CompilerParams(
            dimension_semantics=("parallel", "arbitrary")),
    )(x3)
    return pl.pallas_call(
        _equalize_apply_kernel,
        out_shape=jax.ShapeDtypeStruct((NC, 1, HW), jnp.bfloat16),
        grid=(NC, n_chunks),
        in_specs=[pl.BlockSpec((1, 1, chunk), lambda i, j: (i, 0, j)),
                  pl.BlockSpec((1, 256, 1), lambda i, j: (i, 0, 0))],
        out_specs=pl.BlockSpec((1, 1, chunk), lambda i, j: (i, 0, j)),
        compiler_params=pltpu.CompilerParams(
            dimension_semantics=("parallel", "parallel")),
    )(x3, lut)


# ---------------------------------------------------------------------------
# Op dispatch (bf16 image carried between ops; uint8 only at the boundaries)
# ---------------------------------------------------------------------------

def _get_inverse_affine_matrix(center, angle, translate, scale, shear):
    # Exact port of torchvision._get_inverse_affine_matrix (center=(0,0) for tensors).
    rot = math.radians(angle)
    sx = math.radians(shear[0])
    sy = math.radians(shear[1])
    cx, cy = center
    tx, ty = translate
    a = math.cos(rot - sy) / math.cos(sy)
    b = -math.cos(rot - sy) * math.tan(sx) / math.cos(sy) - math.sin(rot)
    c = math.sin(rot - sy) / math.cos(sy)
    d = -math.sin(rot - sy) * math.tan(sx) / math.cos(sy) + math.cos(rot)
    m = [d, -b, 0.0, -c, a, 0.0]
    m = [v / scale for v in m]
    m[2] += m[0] * (-cx - tx) + m[1] * (-cy - ty)
    m[5] += m[3] * (-cx - tx) + m[4] * (-cy - ty)
    m[2] += cx
    m[5] += cy
    return m


def apply_op_bf16(img_b, op_name, magnitude):
    """Apply one RandAugment op to an integer-valued bf16 NCHW image."""
    N, C, H, W = img_b.shape
    if op_name == "Identity":
        return img_b
    if op_name in ("TranslateX", "TranslateY"):
        t = int(magnitude)
        tx, ty = (t, 0) if op_name == "TranslateX" else (0, t)
        return _translate(img_b.reshape(N * C, H, W), tx, ty).reshape(N, C, H, W)
    if op_name in ("ShearX", "ShearY", "Rotate"):
        if op_name == "ShearX":
            mat = _get_inverse_affine_matrix((0.0, 0.0), 0.0, (0.0, 0.0), 1.0,
                                             (math.degrees(magnitude), 0.0))
        elif op_name == "ShearY":
            mat = _get_inverse_affine_matrix((0.0, 0.0), 0.0, (0.0, 0.0), 1.0,
                                             (0.0, math.degrees(magnitude)))
        else:  # Rotate (torchvision negates the angle for tensor rotate)
            mat = _get_inverse_affine_matrix((0.0, 0.0), -magnitude, (0.0, 0.0),
                                             1.0, (0.0, 0.0))
        return _affine_nearest(img_b.reshape(N * C, H * W), mat, H, W).reshape(N, C, H, W)
    if op_name == "Equalize":
        return _equalize(img_b.reshape(N * C, 1, H * W)).reshape(N, C, H, W)
    if op_name == "Contrast":
        return _contrast(img_b.reshape(N, C, H * W), 1.0 + magnitude).reshape(N, C, H, W)
    if op_name == "Sharpness":
        return _sharpness(img_b.reshape(N * C, H, W), 1.0 + magnitude).reshape(N, C, H, W)

    x2 = img_b.reshape(N * C, H * W)
    if op_name == "Brightness":
        y = _pointwise_call(_brightness_kernel, x2, [1.0 + magnitude])
    elif op_name == "Solarize":
        y = _pointwise_call(_solarize_kernel, x2, [magnitude])
    elif op_name == "Posterize":
        q = float(2 ** (8 - int(magnitude)))
        y = _pointwise_call(_posterize_kernel, x2, [q, 1.0 / q])
    elif op_name == "AutoContrast":
        y = _autocontrast(x2)
    else:
        raise ValueError(f"The provided operator {op_name} is not recognized.")
    return y.reshape(N, C, H, W)


def apply_op(img, op_name, magnitude):
    """uint8 NCHW in/out single-op interface (matches torchvision _apply_op)."""
    return apply_op_bf16(img.astype(jnp.bfloat16), op_name, magnitude).astype(jnp.uint8)


# ---------------------------------------------------------------------------
# RandAugment module (host-side op/magnitude sampling + Pallas ops)
# ---------------------------------------------------------------------------

# Deterministic synthetic "config": per-op sampling probabilities.
_RAND_AUGMENT_PROBS = {
    "Identity": 1.0, "ShearX": 1.0, "ShearY": 1.0, "TranslateX": 1.0,
    "TranslateY": 1.0, "Rotate": 1.0, "Brightness": 1.0, "Contrast": 1.0,
    "Sharpness": 1.0, "Posterize": 1.0, "Solarize": 1.0, "AutoContrast": 1.0,
    "Equalize": 1.0,
}


class RandAugmentPallas:
    def __init__(self, num_ops=2, magnitude=9, num_magnitude_bins=31, probs=None):
        self.num_ops = num_ops
        self.magnitude = magnitude
        self.num_magnitude_bins = num_magnitude_bins
        self.probs = dict(_RAND_AUGMENT_PROBS if probs is None else probs)
        # NOTE: fill=None (module default) -> out-of-bounds pixels are 0.
        # TODO(synk): the fill-mask path of F.affine (fill is not None) is not implemented.
        # TODO(synk): consecutive pointwise ops are still separate pallas_calls (no fusion).

    def _augmentation_space(self, num_bins, image_size):
        # image_size = (width, height), like torchvision F.get_image_size
        return {
            "Identity": (None, False),
            "ShearX": (np.linspace(0.0, 0.3, num_bins), True),
            "ShearY": (np.linspace(0.0, 0.3, num_bins), True),
            "TranslateX": (np.linspace(0.0, 150.0 / 331.0 * image_size[0], num_bins), True),
            "TranslateY": (np.linspace(0.0, 150.0 / 331.0 * image_size[1], num_bins), True),
            "Rotate": (np.linspace(0.0, 30.0, num_bins), True),
            "Brightness": (np.linspace(0.0, 0.9, num_bins), True),
            "Contrast": (np.linspace(0.0, 0.9, num_bins), True),
            "Sharpness": (np.linspace(0.0, 0.9, num_bins), True),
            "Posterize": (8 - np.round(np.arange(num_bins) / ((num_bins - 1) / 4)), False),
            "Solarize": (np.linspace(255.0, 0.0, num_bins), False),
            "AutoContrast": (None, False),
            "Equalize": (None, False),
        }

    def __call__(self, img, key):
        # img: uint8 NCHW.  key: jax PRNG key (replaces torch's global RNG).
        N, C, H, W = img.shape
        space = self._augmentation_space(self.num_magnitude_bins, (W, H))
        names = list(space.keys())
        p = np.array([self.probs[n] for n in names], dtype=np.float64)
        p = p / p.sum()
        # Pre-draw all per-op randomness in one device round trip (no per-op sync).
        k1, k2 = jax.random.split(key)
        op_idx = np.asarray(jax.random.choice(k1, len(names), shape=(self.num_ops,),
                                              p=jnp.asarray(p)))
        signs = np.asarray(jax.random.randint(k2, (self.num_ops,), 0, 2))

        x = img.astype(jnp.bfloat16)     # exact for 0..255; single cast per call
        for i in range(self.num_ops):
            op_name = names[int(op_idx[i])]
            magnitudes, signed = space[op_name]
            magnitude = float(magnitudes[self.magnitude]) if magnitudes is not None else 0.0
            if signed and int(signs[i]) == 1:
                magnitude *= -1.0
            x = apply_op_bf16(x, op_name, magnitude)
        return x.astype(jnp.uint8)


# ---------------------------------------------------------------------------

if __name__ == "__main__":
    root = jax.random.PRNGKey(0)
    k_img, k_aug = jax.random.split(root)
    img = jax.random.randint(k_img, (2, 3, 16, 16), 0, 256, dtype=jnp.int32).astype(jnp.uint8)

    ra = RandAugmentPallas(num_ops=2, magnitude=9, num_magnitude_bins=31)

    # Exercise every augmentation kernel once (deterministic magnitudes).
    space = ra._augmentation_space(ra.num_magnitude_bins, (img.shape[3], img.shape[2]))
    for name, (mags, _signed) in space.items():
        m = float(mags[ra.magnitude]) if mags is not None else 0.0
        out_i = apply_op(img, name, m)
        jax.block_until_ready(out_i)
        assert out_i.shape == img.shape and out_i.dtype == jnp.uint8
        # Also exercise the signed branch for the geometric ops (negative magnitude).
        if name in ("ShearX", "ShearY", "TranslateX", "TranslateY", "Rotate"):
            out_n = apply_op(img, name, -m)
            jax.block_until_ready(out_n)

    # RandAugment forward pass (num_ops randomly sampled ops applied sequentially).
    out = ra(img, k_aug)
    jax.block_until_ready(out)
    assert out.shape == img.shape and out.dtype == jnp.uint8
    print("KERNEL_OK")
</pallas_src>

<mosaic_0001>
module attributes {stable_mosaic.version = 11 : i64} {
  func.func @_affine_gather_kernel(%arg0: i32, %arg1: i32, %arg2: memref<1xi32, #tpu.memory_space<smem>>, %arg3: memref<1xi32, #tpu.memory_space<smem>>, %arg4: memref<1x256xi32, #tpu.memory_space<vmem>>, %arg5: memref<6x256xbf16, #tpu.memory_space<vmem>>, %arg6: memref<6x256xbf16, #tpu.memory_space<vmem>>, %arg7: memref<6x256xf32, #tpu.memory_space<vmem>>) attributes {dimension_semantics = [#tpu.dimension_semantics<parallel>, #tpu.dimension_semantics<arbitrary>], iteration_bounds = array<i64: 1, 1>, scalar_prefetch = 2 : i64, scratch_operands = 1 : i64, tpu.core_type = #tpu.core_type<tc>, window_params = [{transform_indices = @transform_0, window_bounds = array<i64: 1, 256>}, {transform_indices = @transform_1, window_bounds = array<i64: 6, 256>}, {transform_indices = @transform_2, window_bounds = array<i64: 6, 256>}]} {
    %c0_i32 = arith.constant 0 : i32
    %0 = arith.cmpi eq, %arg1, %c0_i32 : i32
    %1 = arith.extui %0 : i1 to i32
    %c0_i32_0 = arith.constant 0 : i32
    %2 = arith.cmpi ne, %1, %c0_i32_0 : i32
    scf.if %2 {
      %cst = arith.constant 0.000000e+00 : f32
      %11 = vector.broadcast %cst : f32 to vector<6x256xf32>
      %c0 = arith.constant 0 : index
      %c0_4 = arith.constant 0 : index
      %12 = vector.load %arg7[%c0, %c0_4] : memref<6x256xf32, #tpu.memory_space<vmem>>, vector<6x256xf32>
      tpu.vector_store %arg7[%c0, %c0_4], %11 {strides = array<i32>} : memref<6x256xf32, #tpu.memory_space<vmem>>, vector<6x256xf32>,
    } else {
    }
    %3 = arith.index_cast %arg0 : i32 to index
    %4 = memref.load %arg3[%3] : memref<1xi32, #tpu.memory_space<smem>>
    %5 = arith.cmpi slt, %arg1, %4 : i32
    %6 = arith.extui %5 : i1 to i32
    %c0_i32_1 = arith.constant 0 : i32
    %7 = arith.cmpi ne, %6, %c0_i32_1 : i32
    scf.if %7 {
      %c1_i32 = arith.constant 1 : i32
      %11 = arith.muli %arg0, %c1_i32 : i32
      %12 = arith.addi %11, %arg1 : i32
      %13 = arith.index_cast %12 : i32 to index
      %14 = memref.load %arg2[%13] : memref<1xi32, #tpu.memory_space<smem>>
      %c256_i32 = arith.constant 256 : i32
      %15 = arith.muli %14, %c256_i32 : i32
      %c0 = arith.constant 0 : index
      %c0_4 = arith.constant 0 : index
      %16 = vector.load %arg4[%c0, %c0_4] : memref<1x256xi32, #tpu.memory_space<vmem>>, vector<1x256xi32>
      %17 = tpu.iota {dimensions = array<i32: 0>} : vector<256x256xi32>
      %18 = vector.broadcast %15 : i32 to vector<256x256xi32>
      %19 = arith.addi %18, %17 : vector<256x256xi32>
      %20 = vector.broadcast %16 : vector<1x256xi32> to vector<256x256xi32>
      %21 = arith.cmpi eq, %19, %20 : vector<256x256xi32>
      %22 = arith.extui %21 : vector<256x256xi1> to vector<256x256xi32>
      %23 = arith.sitofp %22 : vector<256x256xi32> to vector<256x256xf32>
      %24 = arith.truncf %23 : vector<256x256xf32> to vector<256x256xbf16>
      %c0_5 = arith.constant 0 : index
      %c0_6 = arith.constant 0 : index
      %25 = vector.load %arg7[%c0_5, %c0_6] : memref<6x256xf32, #tpu.memory_space<vmem>>, vector<6x256xf32>
      %c0_7 = arith.constant 0 : index
      %c0_8 = arith.constant 0 : index
      %26 = vector.load %arg5[%c0_7, %c0_8] : memref<6x256xbf16, #tpu.memory_space<vmem>>, vector<6x256xbf16>
      %cst = arith.constant dense<0.000000e+00> : vector<6x256xf32>
      %27 = tpu.matmul %26, %24, %cst {dimension_numbers = #tpu.dot_dimension_numbers<[1], [0], [0], [1], [0, 0, 1, 1], [], []>} : vector<6x256xbf16>, vector<256x256xbf16>, vector<6x256xf32> -> vector<6x256xf32>
      %28 = arith.addf %25, %27 : vector<6x256xf32>
      %c0_9 = arith.constant 0 : index
      %c0_10 = arith.constant 0 : index
      %29 = vector.load %arg7[%c0_9, %c0_10] : memref<6x256xf32, #tpu.memory_space<vmem>>, vector<6x256xf32>
      tpu.vector_store %arg7[%c0_9, %c0_10], %28 {strides = array<i32>} : memref<6x256xf32, #tpu.memory_space<vmem>>, vector<6x256xf32>,
    } else {
    }
    %c0_i32_2 = arith.constant 0 : i32
    %8 = arith.cmpi eq, %arg1, %c0_i32_2 : i32
    %9 = arith.extui %8 : i1 to i32
    %c0_i32_3 = arith.constant 0 : i32
    %10 = arith.cmpi ne, %9, %c0_i32_3 : i32
    scf.if %10 {
      %c0 = arith.constant 0 : index
      %c0_4 = arith.constant 0 : index
      %11 = vector.load %arg7[%c0, %c0_4] : memref<6x256xf32, #tpu.memory_space<vmem>>, vector<6x256xf32>
      %12 = arith.truncf %11 : vector<6x256xf32> to vector<6x256xbf16>
      %c0_5 = arith.constant 0 : index
      %c0_6 = arith.constant 0 : index
      %13 = vector.load %arg6[%c0_5, %c0_6] : memref<6x256xbf16, #tpu.memory_space<vmem>>, vector<6x256xbf16>
      tpu.vector_store %arg6[%c0_5, %c0_6], %12 {strides = array<i32>} : memref<6x256xbf16, #tpu.memory_space<vmem>>, vector<6x256xbf16>,
    } else {
    }
    return
  }
  func.func @transform_0(%arg0: i32, %arg1: i32, %arg2: memref<1xi32, #tpu.memory_space<smem>>, %arg3: memref<1xi32, #tpu.memory_space<smem>>) -> (i32, i32) {
    %c0_i32 = arith.constant 0 : i32
    %c0_i32_0 = arith.constant 0 : i32
    return %c0_i32, %arg0 : i32, i32
  }
  func.func @transform_1(%arg0: i32, %arg1: i32, %arg2: memref<1xi32, #tpu.memory_space<smem>>, %arg3: memref<1xi32, #tpu.memory_space<smem>>) -> (i32, i32) {
    %c1_i32 = arith.constant 1 : i32
    %0 = arith.muli %arg0, %c1_i32 : i32
    %1 = arith.addi %0, %arg1 : i32
    %2 = arith.index_cast %1 : i32 to index
    %3 = memref.load %arg2[%2] : memref<1xi32, #tpu.memory_space<smem>>
    %c0_i32 = arith.constant 0 : i32
    %c0_i32_0 = arith.constant 0 : i32
    return %c0_i32, %3 : i32, i32
  }
  func.func @transform_2(%arg0: i32, %arg1: i32, %arg2: memref<1xi32, #tpu.memory_space<smem>>, %arg3: memref<1xi32, #tpu.memory_space<smem>>) -> (i32, i32) {
    %c0_i32 = arith.constant 0 : i32
    %c0_i32_0 = arith.constant 0 : i32
    return %c0_i32, %arg0 : i32, i32
  }
}

</mosaic_0001>

<llo_original>
// kernel: tpu_custom_call.1
$region0: #{tpu_custom_call.1}
  #allocation0 [shape = 'u32[]', space=smem, size = 0x4, offset = 0x4, fixed_abs, tag = 'smem constant byte address 0x4 - core index']
  #allocation1 [shape = 'u32[144,128]{1,0:T(1,128)}', space=vmem, size = 0x12000, scoped, tag = 'internal scratch']
  #allocation2 [shape = 'f32[6,256]{1,0:T(8,128)}', space=vmem, size = 0x2000, scoped, tag = 'scratch operand']
  #allocation3 [shape = 's32[1]{0}', space=sflag, size = 0x4, scoped, tag = 'scoped memory for tpu_custom_call.1']
  #allocation4 [shape = 's32[1]{0:T(128)S(6)}', space=smem, size = 0x200, scoped, tag = 'prefetched SMEM operand 0']
  #allocation5 [shape = 's32[1]{0:T(128)S(6)}', space=smem, size = 0x200, scoped, tag = 'prefetched SMEM operand 1']
  %s0 = inlined_call_operand.<no memory space> [shape: s32[1], index: 0, kind: input, shape index: {}]
  %s1 = inlined_call_operand.<no memory space> [shape: s32[1], index: 1, kind: input, shape index: {}]
  %s2 = inlined_call_operand.vmem [shape: s32[1,256], index: 2, kind: input, shape index: {}]
  %s3 = inlined_call_operand.hbm [shape: bf16[6,256], index: 3, kind: input, shape index: {}]
  %s4 = inlined_call_operand.hbm [shape: bf16[6,256], index: 4, kind: output, shape index: {}]
  %s5 = sld [smem:[#allocation0]]
  $region34: #{tpu_custom_call.1} parent=0
    _
  %s7 = ssub.s32 1, %s5
  %s8 = scalar_select 0, %s7, %s5
  %9 = sst [smem:[#allocation4]] %s0
  %10 = sst [smem:[#allocation5]] %s1
  $region1: #{tpu_custom_call.1} parent=0
    #allocation6 [shape = 'u8[4096]{0}', space=vmem, size = 0x1000, scoped, tag = 'input window, operand 3, single buffered']
    #allocation7 [shape = 's32[1]{0}', space=sflag, size = 0x4, scoped, tag = 'scoped memory for tpu_custom_call.1']
    #allocation8 [shape = 's32[1]{0}', space=sflag, size = 0x4, scoped, tag = 'scoped memory for tpu_custom_call.1']
    #allocation9 [shape = 'u8[4096]{0}', space=vmem, size = 0x1000, scoped, tag = 'output window, operand 0, single buffered']
    %11 = vsyncpa [#allocation7], 0
    %12 = vsyncpa [#allocation8], 0
    // Predicated region
    $region2: #{tpu_custom_call.1} parent=1 // pred_check
      _
    $region3: #{tpu_custom_call.1} parent=1 // pred_check_branch
      %14 = sbr.rel (0) target = $region5
    $region4: #{tpu_custom_call.1} parent=1 // pred_region
      _
    $region5: #{tpu_custom_call.1} parent=1 // pred_fallthru
      _
    // Predicated region
    $region6: #{tpu_custom_call.1} parent=1 // pred_check
      _
    $region7: #{tpu_custom_call.1} parent=1 // pred_check_branch
      %16 = sbr.rel (0) target = $region9
    $region8: #{tpu_custom_call.1} parent=1 // pred_region
      %s17 = sadd.s32 0, 0
      %s18 = sld [smem:[#allocation4 + %s17]]
      %s19 = smul.u32 2, %s18
      %s21 = ssub.s32 128, 128
      %22 = vsyncadd [#allocation7], %s21
      %s23 = smul.addr %s19, 64
      %s24 = scalar_lea.hbm %s3, %s23
      %s26 = sshll.u32 [#allocation6], 4
      %s27 = int_to_ptr.vmem [resolvable:$true] %s26
      %29 = dma.hbm_to_vmem [thread:$0]  %s24, 128, %s27, [#allocation7]
    $region9: #{tpu_custom_call.1} parent=1 // pred_fallthru
      _
    // Predicated region
    $region10: #{tpu_custom_call.1} parent=1 // pred_check
      _
    $region11: #{tpu_custom_call.1} parent=1 // pred_check_branch
      %31 = sbr.rel (0) target = $region13
    $region12: #{tpu_custom_call.1} parent=1 // pred_region
      %32 = dma.done [#allocation7], 128
    $region13: #{tpu_custom_call.1} parent=1 // pred_fallthru
      _
    %s33 = sadd.s32 0, 0
    %s34 = sld [smem:[#allocation4 + %s33]]
    %s35 = smul.u32 2, %s34
    %p36 = scmp.eq.s32.totalorder 0, 0
    // Predicated region
    $region14: #{tpu_custom_call.1} parent=1 // pred_check
      %p37 = pneg %p36
    $region15: #{tpu_custom_call.1} parent=1 // pred_check_branch
      %39 = sbr.rel (%p37) target = $region17
    $region16: #{tpu_custom_call.1} parent=1 // pred_region
      %40 = vst [vmem:[#allocation2] sm:$0x3f] 0.0
      %41 = vst [vmem:[#allocation2 + $0x8] sm:$0x3f] 0.0
    $region17: #{tpu_custom_call.1} parent=1 // pred_fallthru
      _
    %s42 = sld [smem:[#allocation5]]
    %p43 = scmp.lt.s32.totalorder 0, %s42
    // Predicated region
    $region18: #{tpu_custom_call.1} parent=1 // pred_check
      %p44 = pneg %p43
    $region19: #{tpu_custom_call.1} parent=1 // pred_check_branch
      %46 = sbr.rel (%p44) target = $region21
    $region20: #{tpu_custom_call.1} parent=1 // pred_region
      %s47 = sadd.s32 0, 0
      %s48 = sld [smem:[#allocation4 + %s47]]
      %s49 = smul.u32 %s48, 256
      %v50 = vld [vmem:[%s2] sm:$0x3]
      %v51 = vlaneseq
      %v52 = vshrl.u32 %v51, 7
      %v53 = vadd.s32 %v52, 8
      %v54 = vadd.s32 %v52, 16
      %v55 = vadd.s32 %v52, 24
      %v56 = vadd.s32 %v52, 32
      %v57 = vadd.s32 %v52, 40
      %v58 = vadd.s32 %v52, 48
      %v59 = vadd.s32 %v52, 56
      %v60 = vadd.s32 %v52, 64
      %v61 = vadd.s32 %v52, 72
      %v62 = vadd.s32 %v52, 80
      %v63 = vadd.s32 %v52, 88
      %v64 = vadd.s32 %v52, 96
      %v65 = vadd.s32 %v52, 104
      %v66 = vadd.s32 %v52, 112
      %v67 = vadd.s32 %v52, 120
      %v68 = vadd.s32 %v52, 128
      %v69 = vadd.s32 %v52, 136
      %v70 = vadd.s32 %v52, 144
      %v71 = vadd.s32 %v52, 152
      %v72 = vadd.s32 %v52, 160
      %v73 = vadd.s32 %v52, 168
      %v74 = vadd.s32 %v52, 176
      %v75 = vadd.s32 %v52, 184
      %v76 = vadd.s32 %v52, 192
      %v77 = vadd.s32 %v52, 200
      %v78 = vadd.s32 %v52, 208
      %v79 = vadd.s32 %v52, 216
      %v80 = vadd.s32 %v52, 224
      %v81 = vadd.s32 %v52, 232
      %v82 = vadd.s32 %v52, 240
      %v83 = vadd.s32 %v52, 248
      %v84 = vstv %s49
      %v85 = vadd.s32 %v84, %v52
      %v86 = vadd.s32 %v84, %v53
      %v87 = vadd.s32 %v84, %v54
      %v88 = vadd.s32 %v84, %v55
      %v89 = vadd.s32 %v84, %v56
      %v90 = vadd.s32 %v84, %v57
      %v91 = vadd.s32 %v84, %v58
      %v92 = vadd.s32 %v84, %v59
      %v93 = vadd.s32 %v84, %v60
      %v94 = vadd.s32 %v84, %v61
      %v95 = vadd.s32 %v84, %v62
      %v96 = vadd.s32 %v84, %v63
      %v97 = vadd.s32 %v84, %v64
      %v98 = vadd.s32 %v84, %v65
      %v99 = vadd.s32 %v84, %v66
      %v100 = vadd.s32 %v84, %v67
      %v101 = vadd.s32 %v84, %v68
      %v102 = vadd.s32 %v84, %v69
      %v103 = vadd.s32 %v84, %v70
      %v104 = vadd.s32 %v84, %v71
      %v105 = vadd.s32 %v84, %v72
      %v106 = vadd.s32 %v84, %v73
      %v107 = vadd.s32 %v84, %v74
      %v108 = vadd.s32 %v84, %v75
      %v109 = vadd.s32 %v84, %v76
      %v110 = vadd.s32 %v84, %v77
      %v111 = vadd.s32 %v84, %v78
      %v112 = vadd.s32 %v84, %v79
      %v113 = vadd.s32 %v84, %v80
      %v114 = vadd.s32 %v84, %v81
      %v115 = vadd.s32 %v84, %v82
      %v116 = vadd.s32 %v84, %v83
      %v117 = vlaneseq
      %v118 = vshrl.u32 %v117, 7
      %v119 = vsub.s32 0, %v118
      %v120 = vrot.slane %v50, %v119
      %v121 = vlaneseq
      %v122 = vshrl.u32 %v121, 7
      %v123 = vsub.s32 1, %v122
      %v124 = vrot.slane %v50, %v123
      %vm125 = vcmp.eq.s32.totalorder %v85, %v120
      %vm126 = vcmp.eq.s32.totalorder %v85, %v124
      %vm127 = vcmp.eq.s32.totalorder %v86, %v120
      %vm128 = vcmp.eq.s32.totalorder %v86, %v124
      %vm129 = vcmp.eq.s32.totalorder %v87, %v120
      %vm130 = vcmp.eq.s32.totalorder %v87, %v124
      %vm131 = vcmp.eq.s32.totalorder %v88, %v120
      %vm132 = vcmp.eq.s32.totalorder %v88, %v124
      %vm133 = vcmp.eq.s32.totalorder %v89, %v120
      %vm134 = vcmp.eq.s32.totalorder %v89, %v124
      %vm135 = vcmp.eq.s32.totalorder %v90, %v120
      %vm136 = vcmp.eq.s32.totalorder %v90, %v124
      %vm137 = vcmp.eq.s32.totalorder %v91, %v120
      %vm138 = vcmp.eq.s32.totalorder %v91, %v124
      %vm139 = vcmp.eq.s32.totalorder %v92, %v120
      %vm140 = vcmp.eq.s32.totalorder %v92, %v124
      %vm141 = vcmp.eq.s32.totalorder %v93, %v120
      %vm142 = vcmp.eq.s32.totalorder %v93, %v124
      %vm143 = vcmp.eq.s32.totalorder %v94, %v120
      %vm144 = vcmp.eq.s32.totalorder %v94, %v124
      %vm145 = vcmp.eq.s32.totalorder %v95, %v120
      %vm146 = vcmp.eq.s32.totalorder %v95, %v124
      %vm147 = vcmp.eq.s32.totalorder %v96, %v120
      %vm148 = vcmp.eq.s32.totalorder %v96, %v124
      %vm149 = vcmp.eq.s32.totalorder %v97, %v120
      %vm150 = vcmp.eq.s32.totalorder %v97, %v124
      %vm151 = vcmp.eq.s32.totalorder %v98, %v120
      %vm152 = vcmp.eq.s32.totalorder %v98, %v124
      %vm153 = vcmp.eq.s32.totalorder %v99, %v120
      %vm154 = vcmp.eq.s32.totalorder %v99, %v124
      %vm155 = vcmp.eq.s32.totalorder %v100, %v120
      %vm156 = vcmp.eq.s32.totalorder %v100, %v124
      %vm157 = vcmp.eq.s32.totalorder %v101, %v120
      %vm158 = vcmp.eq.s32.totalorder %v101, %v124
      %vm159 = vcmp.eq.s32.totalorder %v102, %v120
      %vm160 = vcmp.eq.s32.totalorder %v102, %v124
      %vm161 = vcmp.eq.s32.totalorder %v103, %v120
      %vm162 = vcmp.eq.s32.totalorder %v103, %v124
      %vm163 = vcmp.eq.s32.totalorder %v104, %v120
      %vm164 = vcmp.eq.s32.totalorder %v104, %v124
      %vm165 = vcmp.eq.s32.totalorder %v105, %v120
      %vm166 = vcmp.eq.s32.totalorder %v105, %v124
      %vm167 = vcmp.eq.s32.totalorder %v106, %v120
      %vm168 = vcmp.eq.s32.totalorder %v106, %v124
      %vm169 = vcmp.eq.s32.totalorder %v107, %v120
      %vm170 = vcmp.eq.s32.totalorder %v107, %v124
      %vm171 = vcmp.eq.s32.totalorder %v108, %v120
      %vm172 = vcmp.eq.s32.totalorder %v108, %v124
      %vm173 = vcmp.eq.s32.totalorder %v109, %v120
      %vm174 = vcmp.eq.s32.totalorder %v109, %v124
      %vm175 = vcmp.eq.s32.totalorder %v110, %v120
      %vm176 = vcmp.eq.s32.totalorder %v110, %v124
      %vm177 = vcmp.eq.s32.totalorder %v111, %v120
      %vm178 = vcmp.eq.s32.totalorder %v111, %v124
      %vm179 = vcmp.eq.s32.totalorder %v112, %v120
      %vm180 = vcmp.eq.s32.totalorder %v112, %v124
      %vm181 = vcmp.eq.s32.totalorder %v113, %v120
      %vm182 = vcmp.eq.s32.totalorder %v113, %v124
      %vm183 = vcmp.eq.s32.totalorder %v114, %v120
      %vm184 = vcmp.eq.s32.totalorder %v114, %v124
      %vm185 = vcmp.eq.s32.totalorder %v115, %v120
      %vm186 = vcmp.eq.s32.totalorder %v115, %v124
      %vm187 = vcmp.eq.s32.totalorder %v116, %v120
      %vm188 = vcmp.eq.s32.totalorder %v116, %v124
      %v189 = vsel %vm125, 1, 0
      %v190 = vsel %vm126, 1, 0
      %v191 = vsel %vm127, 1, 0
      %v192 = vsel %vm128, 1, 0
      %v193 = vsel %vm129, 1, 0
      %v194 = vsel %vm130, 1, 0
      %v195 = vsel %vm131, 1, 0
      %v196 = vsel %vm132, 1, 0
      %v197 = vsel %vm133, 1, 0
      %v198 = vsel %vm134, 1, 0
      %v199 = vsel %vm135, 1, 0
      %v200 = vsel %vm136, 1, 0
      %v201 = vsel %vm137, 1, 0
      %v202 = vsel %vm138, 1, 0
      %v203 = vsel %vm139, 1, 0
      %v204 = vsel %vm140, 1, 0
      %v205 = vsel %vm141, 1, 0
      %v206 = vsel %vm142, 1, 0
      %v207 = vsel %vm143, 1, 0
      %v208 = vsel %vm144, 1, 0
      %v209 = vsel %vm145, 1, 0
      %v210 = vsel %vm146, 1, 0
      %v211 = vsel %vm147, 1, 0
      %v212 = vsel %vm148, 1, 0
      %v213 = vsel %vm149, 1, 0
      %v214 = vsel %vm150, 1, 0
      %v215 = vsel %vm151, 1, 0
      %v216 = vsel %vm152, 1, 0
      %v217 = vsel %vm153, 1, 0
      %v218 = vsel %vm154, 1, 0
      %v219 = vsel %vm155, 1, 0
      %v220 = vsel %vm156, 1, 0
      %v221 = vsel %vm157, 1, 0
      %v222 = vsel %vm158, 1, 0
      %v223 = vsel %vm159, 1, 0
      %v224 = vsel %vm160, 1, 0
      %v225 = vsel %vm161, 1, 0
      %v226 = vsel %vm162, 1, 0
      %v227 = vsel %vm163, 1, 0
      %v228 = vsel %vm164, 1, 0
      %v229 = vsel %vm165, 1, 0
      %v230 = vsel %vm166, 1, 0
      %v231 = vsel %vm167, 1, 0
      %v232 = vsel %vm168, 1, 0
      %v233 = vsel %vm169, 1, 0
      %v234 = vsel %vm170, 1, 0
      %v235 = vsel %vm171, 1, 0
      %v236 = vsel %vm172, 1, 0
      %v237 = vsel %vm173, 1, 0
      %v238 = vsel %vm174, 1, 0
      %v239 = vsel %vm175, 1, 0
      %v240 = vsel %vm176, 1, 0
      %v241 = vsel %vm177, 1, 0
      %v242 = vsel %vm178, 1, 0
      %v243 = vsel %vm179, 1, 0
      %v244 = vsel %vm180, 1, 0
      %v245 = vsel %vm181, 1, 0
      %v246 = vsel %vm182, 1, 0
      %v247 = vsel %vm183, 1, 0
      %v248 = vsel %vm184, 1, 0
      %v249 = vsel %vm185, 1, 0
      %v250 = vsel %vm186, 1, 0
      %v251 = vsel %vm187, 1, 0
      %v252 = vsel %vm188, 1, 0
      %v253 = vcvt.s32.f32 %v189
      %v254 = vcvt.s32.f32 %v190
      %v255 = vcvt.s32.f32 %v191
      %v256 = vcvt.s32.f32 %v192
      %v257 = vcvt.s32.f32 %v193
      %v258 = vcvt.s32.f32 %v194
      %v259 = vcvt.s32.f32 %v195
      %v260 = vcvt.s32.f32 %v196
      %v261 = vcvt.s32.f32 %v197
      %v262 = vcvt.s32.f32 %v198
      %v263 = vcvt.s32.f32 %v199
      %v264 = vcvt.s32.f32 %v200
      %v265 = vcvt.s32.f32 %v201
      %v266 = vcvt.s32.f32 %v202
      %v267 = vcvt.s32.f32 %v203
      %v268 = vcvt.s32.f32 %v204
      %v269 = vcvt.s32.f32 %v205
      %v270 = vcvt.s32.f32 %v206
      %v271 = vcvt.s32.f32 %v207
      %v272 = vcvt.s32.f32 %v208
      %v273 = vcvt.s32.f32 %v209
      %v274 = vcvt.s32.f32 %v210
      %v275 = vcvt.s32.f32 %v211
      %v276 = vcvt.s32.f32 %v212
      %v277 = vcvt.s32.f32 %v213
      %v278 = vcvt.s32.f32 %v214
      %v279 = vcvt.s32.f32 %v215
      %v280 = vcvt.s32.f32 %v216
      %v281 = vcvt.s32.f32 %v217
      %v282 = vcvt.s32.f32 %v218
      %v283 = vcvt.s32.f32 %v219
      %v284 = vcvt.s32.f32 %v220
      %v285 = vcvt.s32.f32 %v221
      %v286 = vcvt.s32.f32 %v222
      %v287 = vcvt.s32.f32 %v223
      %v288 = vcvt.s32.f32 %v224
      %v289 = vcvt.s32.f32 %v225
      %v290 = vcvt.s32.f32 %v226
      %v291 = vcvt.s32.f32 %v227
      %v292 = vcvt.s32.f32 %v228
      %v293 = vcvt.s32.f32 %v229
      %v294 = vcvt.s32.f32 %v230
      %v295 = vcvt.s32.f32 %v231
      %v296 = vcvt.s32.f32 %v232
      %v297 = vcvt.s32.f32 %v233
      %v298 = vcvt.s32.f32 %v234
      %v299 = vcvt.s32.f32 %v235
      %v300 = vcvt.s32.f32 %v236
      %v301 = vcvt.s32.f32 %v237
      %v302 = vcvt.s32.f32 %v238
      %v303 = vcvt.s32.f32 %v239
      %v304 = vcvt.s32.f32 %v240
      %v305 = vcvt.s32.f32 %v241
      %v306 = vcvt.s32.f32 %v242
      %v307 = vcvt.s32.f32 %v243
      %v308 = vcvt.s32.f32 %v244
      %v309 = vcvt.s32.f32 %v245
      %v310 = vcvt.s32.f32 %v246
      %v311 = vcvt.s32.f32 %v247
      %v312 = vcvt.s32.f32 %v248
      %v313 = vcvt.s32.f32 %v249
      %v314 = vcvt.s32.f32 %v250
      %v315 = vcvt.s32.f32 %v251
      %v316 = vcvt.s32.f32 %v252
      %v317 = vpack.c.bf16 %v255, %v253
      %v318 = vpack.c.bf16 %v256, %v254
      %v319 = vpack.c.bf16 %v259, %v257
      %v320 = vpack.c.bf16 %v260, %v258
      %v321 = vpack.c.bf16 %v263, %v261
      %v322 = vpack.c.bf16 %v264, %v262
      %v323 = vpack.c.bf16 %v267, %v265
      %v324 = vpack.c.bf16 %v268, %v266
      %v325 = vpack.c.bf16 %v271, %v269
      %v326 = vpack.c.bf16 %v272, %v270
      %v327 = vpack.c.bf16 %v275, %v273
      %v328 = vpack.c.bf16 %v276, %v274
      %v329 = vpack.c.bf16 %v279, %v277
      %v330 = vpack.c.bf16 %v280, %v278
      %v331 = vpack.c.bf16 %v283, %v281
      %v332 = vpack.c.bf16 %v284, %v282
      %v333 = vpack.c.bf16 %v287, %v285
      %v334 = vpack.c.bf16 %v288, %v286
      %v335 = vpack.c.bf16 %v291, %v289
      %v336 = vpack.c.bf16 %v292, %v290
      %v337 = vpack.c.bf16 %v295, %v293
      %v338 = vpack.c.bf16 %v296, %v294
      %v339 = vpack.c.bf16 %v299, %v297
      %v340 = vpack.c.bf16 %v300, %v298
      %v341 = vpack.c.bf16 %v303, %v301
      %v342 = vpack.c.bf16 %v304, %v302
      %v343 = vpack.c.bf16 %v307, %v305
      %v344 = vpack.c.bf16 %v308, %v306
      %v345 = vpack.c.bf16 %v311, %v309
      %v346 = vpack.c.bf16 %v312, %v310
      %v347 = vpack.c.bf16 %v315, %v313
      %v348 = vpack.c.bf16 %v316, %v314
      %v349 = vld [vmem:[#allocation2] sm:$0x3f]
      %v350 = vld [vmem:[#allocation2 + $0x8] sm:$0x3f]
      %v351 = vld [vmem:[#allocation6] sm:$0x77]
      %v353 = vunpack.c.l.b16 %v351
      %v354 = vunpack.c.h.b16 %v351
      %v355 = vpack.c.b16 %v353, %v353
      %v356 = vpack.c.b16 %v354, %v354
      %359 = vmatprep.subr.bf16.mxu0 %v332
      %360 = vmatpush1.bf16.msra.mxu0 %v331
      %361 = vmatprep.subr.bf16.mxu0 %v330
      %362 = vmatpush1.bf16.msra.mxu0 %v329
      %363 = vmatprep.subr.bf16.mxu0 %v328
      %364 = vmatpush1.bf16.msra.mxu0 %v327
      %365 = vmatprep.subr.bf16.mxu0 %v326
      %366 = vmatpush1.bf16.msra.mxu0 %v325
      %367 = vmatprep.subr.bf16.mxu0 %v324
      %368 = vmatpush1.bf16.msra.mxu0 %v323
      %369 = vmatprep.subr.bf16.mxu0 %v322
      %370 = vmatpush1.bf16.msra.mxu0 %v321
      %371 = vmatprep.subr.bf16.mxu0 %v320
      %372 = vmatpush1.bf16.msra.mxu0 %v319
      %373 = vmatprep.subr.bf16.mxu0 %v318
      %374 = vmatpush1.bf16.msra.mxu0 %v317
      %375 = vmatprep.subr.bf16.mxu0 %v348
      %376 = vmatpush2.bf16.msra.mxu0 %v347
      %377 = vmatprep.subr.bf16.mxu0 %v346
      %378 = vmatpush2.bf16.msra.mxu0 %v345
      %379 = vmatprep.subr.bf16.mxu0 %v344
      %380 = vmatpush2.bf16.msra.mxu0 %v343
      %381 = vmatprep.subr.bf16.mxu0 %v342
      %382 = vmatpush2.bf16.msra.mxu0 %v341
      %383 = vmatprep.subr.bf16.mxu0 %v340
      %384 = vmatpush2.bf16.msra.mxu0 %v339
      %385 = vmatprep.subr.bf16.mxu0 %v338
      %386 = vmatpush2.bf16.msra.mxu0 %v337
      %387 = vmatprep.subr.bf16.mxu0 %v336
      %388 = vmatpush2.bf16.msra.mxu0 %v335
      %389 = vmatprep.subr.bf16.mxu0 %v334
      %390 = vmatpush2.bf16.msra.mxu0 %v333
      %391 = vmatprep.mubr.bf16.mxu0 %v356
      %392 = vmatmul.mubr.bf16.gmra.mxu0 %v355
      %v393 = vpop.f32.mrf.mxu0
      %v394 = vadd.f32 0.0, %v393
      %v395 = vpop.f32.mrf.mxu0
      %v396 = vadd.f32 0.0, %v395
      %v397 = vpop.f32.mrf.mxu0
      %v398 = vpop.f32.mrf.mxu0
      %399 = vdwg.mxu0
      %v400 = vadd.f32 %v349, %v394
      %v401 = vadd.f32 %v350, %v396
      %402 = vst [vmem:[#allocation2] sm:$0x3f] %v400
      %403 = vst [vmem:[#allocation2 + $0x8] sm:$0x3f] %v401
    $region21: #{tpu_custom_call.1} parent=1 // pred_fallthru
      _
    // Predicated region
    $region22: #{tpu_custom_call.1} parent=1 // pred_check
      %p404 = pneg %p36
    $region23: #{tpu_custom_call.1} parent=1 // pred_check_branch
      %406 = sbr.rel (%p404) target = $region25
    $region24: #{tpu_custom_call.1} parent=1 // pred_region
      %v407 = vld [vmem:[#allocation2] sm:$0x3f]
      %v408 = vld [vmem:[#allocation2 + $0x8] sm:$0x3f]
      %v409 = vpack.c.bf16 %v407, %v407
      %v410 = vpack.c.bf16 %v408, %v408
      %v413 = vunpack.c.l.b16 %v409
      %v414 = vunpack.c.l.b16 %v410
      %v415 = vpack.c.b16 %v414, %v413
      %417 = vst [vmem:[#allocation9] sm:$0x77] %v415
    $region25: #{tpu_custom_call.1} parent=1 // pred_fallthru
      _
    // Predicated region
    $region26: #{tpu_custom_call.1} parent=1 // pred_check
      _
    $region27: #{tpu_custom_call.1} parent=1 // pred_check_branch
      %419 = sbr.rel (0) target = $region29
    $region28: #{tpu_custom_call.1} parent=1 // pred_region
      %s421 = ssub.s32 128, 128
      %422 = vsyncadd [#allocation8], %s421
      %s424 = sshll.u32 [#allocation9], 4
      %s425 = int_to_ptr.vmem [resolvable:$true] %s424
      %427 = dma.vmem_to_hbm [thread:$0]  %s425, 128, %s4, [#allocation8]
    $region29: #{tpu_custom_call.1} parent=1 // pred_fallthru
      _
    // Predicated region
    $region30: #{tpu_custom_call.1} parent=1 // pred_check
      _
    $region31: #{tpu_custom_call.1} parent=1 // pred_check_branch
      %429 = sbr.rel (0) target = $region33
    $region32: #{tpu_custom_call.1} parent=1 // pred_region
      %430 = dma.done [#allocation8], 128
    $region33: #{tpu_custom_call.1} parent=1 // pred_fallthru
      _
    %431 = vsyncpa [#allocation7], 1
    %432 = vsyncpa [#allocation8], 1

</llo_original>
